<compile_context>
chip_gen: v5e
topology: v5e:2x2
jax: 0.10.0
libtpu: 0.0.40
codegen_flags: <defaults>
</compile_context>

<pallas_src>
import functools
import math

import jax
import jax.numpy as jnp
from jax import lax
from jax.experimental import pallas as pl
from jax.experimental.pallas import tpu as pltpu


def _round_up(x, m):
    return (x + m - 1) // m * m


@functools.lru_cache(maxsize=None)
def _vmem_limit_bytes():
    cap = 64 * 1024 * 1024
    try:
        cap = int(pltpu.get_tpu_info().vmem_capacity_bytes)
    except Exception:
        pass
    # Leave headroom for internal scratch (48 MiB budget on v7x, 96 MiB on v5e/v6e).
    return max(32 * 1024 * 1024, min(int(cap * 0.75), 96 * 1024 * 1024))


# --------------------------- Pallas kernels ---------------------------------

def _mm_bias_kernel(a_ref, b_ref, bias_ref, o_ref):
    # Output block is resident across the (innermost, "arbitrary") K axis.
    @pl.when(pl.program_id(2) == 0)
    def _():
        o_ref[...] = jnp.broadcast_to(bias_ref[...], o_ref.shape)

    a = a_ref[...]
    if a.dtype != jnp.bfloat16:            # only the stride-1 1x1 (reshape-only) path
        a = a.astype(jnp.bfloat16)         # feeds f32; patches are pre-cast to bf16.
    o_ref[...] += jnp.dot(a, b_ref[...], preferred_element_type=jnp.float32)


@functools.lru_cache(maxsize=None)
def _matmul_bias_fn(Mb, K, N, a_dtype_name):
    """Cached Pallas matmul: (Mb,Kp) A @ (Kp,N) bf16 + bias -> (Mb,N) f32.

    Returns (callable, Kp).  M/N use cdiv grids; at ragged edges the over-read
    A rows / B lanes only land in output regions that Pallas discards as
    out-of-bounds writes (no explicit masking in the kernel).  K is padded by
    the caller to Kp (a multiple of 128) so accumulation never sees garbage.
    """
    a_bytes = 2 if a_dtype_name == "bfloat16" else 4
    tm = min(256, _round_up(Mb, 8))

    Kp = _round_up(K, 128)
    if Kp <= 4608:
        tk = Kp                                   # single K step, no K grid overhead
    else:
        units = Kp // 128
        d = 1
        for c in range(1, min(units, 16) + 1):    # largest 128-multiple divisor <= 2048
            if units % c == 0:
                d = c
        tk = d * 128

    # Choose the widest N tile whose double-buffered working set fits comfortably in
    # VMEM (generation-aware; keeps v7x' 48 MiB budget double-buffered).
    n_full = _round_up(N, 128)
    budget = int(_vmem_limit_bytes() * 0.6)
    candidates = sorted(
        {min(n_full, 1024)} | {c for c in (1024, 512, 256, 128) if c <= n_full},
        reverse=True)
    tn = 128
    for c in candidates:
        est = 2 * (tm * tk * a_bytes + tk * c * 2 + c * 4 + tm * c * 4)
        if est <= budget:
            tn = c
            break

    grid = (pl.cdiv(Mb, tm), pl.cdiv(N, tn), Kp // tk)

    mm = pl.pallas_call(
        _mm_bias_kernel,
        out_shape=jax.ShapeDtypeStruct((Mb, N), jnp.float32),
        grid_spec=pltpu.PrefetchScalarGridSpec(
            num_scalar_prefetch=0,
            grid=grid,
            in_specs=[
                pl.BlockSpec((tm, tk), lambda i, j, k: (i, k)),
                pl.BlockSpec((tk, tn), lambda i, j, k: (k, j)),
                pl.BlockSpec((1, tn), lambda i, j, k: (0, j)),
            ],
            out_specs=pl.BlockSpec((tm, tn), lambda i, j, k: (i, j)),
        ),
        compiler_params=pltpu.CompilerParams(
            dimension_semantics=("parallel", "parallel", "arbitrary"),
            vmem_limit_bytes=_vmem_limit_bytes(),
        ),
    )
    return mm, Kp


def matmul_bias(a, b, bias):
    """a: (M,K) f32 or bf16, b: (K,N) bf16 weights, bias: (N,) f32 -> (M,N) f32."""
    M, K = a.shape
    _, N = b.shape
    # Small M: bucket to multiples of 64 so many layers / scales share one compiled
    # kernel.  Large M (real DeepLab inputs): exact shape, no pad/slice round trip.
    Mb = M if M >= 1024 else _round_up(max(M, 8), 64)
    mm, Kp = _matmul_bias_fn(Mb, K, N, str(a.dtype))
    pm, pk = Mb - M, Kp - K
    if pm or pk:
        a = jnp.pad(a, ((0, pm), (0, pk)))
    if pk:
        b = jnp.pad(b, ((0, pk), (0, 0)))
    out = mm(a, b, bias.reshape(1, N).astype(jnp.float32))
    return out if pm == 0 else out[:M]


def _max3_kernel(a_ref, b_ref, c_ref, o_ref):
    o_ref[...] = jnp.maximum(jnp.maximum(a_ref[...], b_ref[...]), c_ref[...])


@functools.lru_cache(maxsize=None)
def _max3_fn(total):
    cols = 512                                    # lane-dense output (multiple of 128)
    rows = -(-total // cols)
    padded = rows * cols
    tr = rows if rows <= 256 else 256

    f = pl.pallas_call(
        _max3_kernel,
        out_shape=jax.ShapeDtypeStruct((rows, cols), jnp.float32),
        grid_spec=pltpu.PrefetchScalarGridSpec(
            num_scalar_prefetch=0,
            grid=(pl.cdiv(rows, tr),),
            in_specs=[pl.BlockSpec((tr, cols), lambda i: (i, 0))] * 3,
            out_specs=pl.BlockSpec((tr, cols), lambda i: (i, 0)),
        ),
        compiler_params=pltpu.CompilerParams(
            dimension_semantics=("parallel",),
            vmem_limit_bytes=_vmem_limit_bytes(),
        ),
    )

    def g(a, b, c):
        pad = padded - total
        a2 = jnp.pad(a, (0, pad)).reshape(rows, cols)
        b2 = jnp.pad(b, (0, pad)).reshape(rows, cols)
        c2 = jnp.pad(c, (0, pad)).reshape(rows, cols)
        return f(a2, b2, c2).reshape(padded)[:total]

    return jax.jit(g)


_MAX3_PALLAS_MIN_ELEMS = 1 << 20


def elementwise_max3(a, b, c):
    shape = a.shape
    total = math.prod(shape)
    if total < _MAX3_PALLAS_MIN_ELEMS:
        # Tiny logits: the pad/reshape/dispatch overhead of a Pallas call dominates;
        # XLA fuses the 3-way max for free.
        return jnp.maximum(jnp.maximum(a, b), c)
    out = _max3_fn(total)(a.reshape(-1), b.reshape(-1), c.reshape(-1))
    return out.reshape(shape)


# --------------------------- JAX glue (layout / norm / resize) ---------------

def conv2d(x, w, bias=None, stride=1, padding=0, dilation=1):
    """NHWC conv2d. Weight layout (KH, KW, Cin, Cout), bf16. Hot path = Pallas matmul."""
    N, H, W, C = x.shape
    KH, KW, Cin, Cout = w.shape
    Hout = (H + 2 * padding - dilation * (KH - 1) - 1) // stride + 1
    Wout = (W + 2 * padding - dilation * (KW - 1) - 1) // stride + 1
    xp = jnp.pad(x, ((0, 0), (padding, padding), (padding, padding), (0, 0)))

    cols, w_rows = [], []
    for kh in range(KH):
        h0 = kh * dilation
        h_dead = (h0 + stride * (Hout - 1) < padding) or (h0 >= padding + H)
        for kw in range(KW):
            w0 = kw * dilation
            w_dead = (w0 + stride * (Wout - 1) < padding) or (w0 >= padding + W)
            if h_dead or w_dead:
                continue  # tap samples only zero padding -> contributes nothing
            sl = xp[:, h0:h0 + stride * (Hout - 1) + 1:stride,
                    w0:w0 + stride * (Wout - 1) + 1:stride, :]
            cols.append(sl)
            w_rows.append(w[kh, kw])              # (Cin, Cout) bf16

    ntap = len(cols)
    if KH == 1 and KW == 1 and stride == 1 and padding == 0:
        # Pure reshape of x: feed f32 activations directly (no extra HBM cast pass);
        # the kernel casts to bf16 in-register.
        patches = x.reshape(N * Hout * Wout, Cin)
        wm = w_rows[0]
    else:
        # Patch matrix has to be materialized anyway -> store it in bf16 (halves the
        # dominant, ntap-x inflated HBM write + re-read traffic).
        patches = jnp.concatenate(
            [c.astype(jnp.bfloat16) for c in cols], axis=-1
        ).reshape(N * Hout * Wout, ntap * Cin)
        wm = jnp.concatenate(w_rows, axis=0)      # (ntap*Cin, Cout) bf16

    if bias is None:
        bias = jnp.zeros((Cout,), jnp.float32)
    out = matmul_bias(patches, wm, bias)
    return out.reshape(N, Hout, Wout, Cout)


def relu(x):
    return jnp.maximum(x, 0.0)


def batchnorm(x, eps=1e-5):
    # nn.BatchNorm2d in (default) training mode with weight=1, bias=0, as initialized
    # in the reference ResNet.__init__. Normalizes with biased batch statistics.
    mean = jnp.mean(x, axis=(0, 1, 2), keepdims=True)
    var = jnp.var(x, axis=(0, 1, 2), keepdims=True)
    return (x - mean) * lax.rsqrt(var + eps)


def maxpool_3x3_s2_p1_ceil(x):
    # nn.MaxPool2d(kernel_size=3, stride=2, padding=1, ceil_mode=True), NHWC.
    N, H, W, C = x.shape

    def out_size(h):
        o = -(-(h + 2 - 3) // 2) + 1
        if (o - 1) * 2 >= h + 1:
            o -= 1
        return o

    Ho, Wo = out_size(H), out_size(W)
    ph = (Ho - 1) * 2 + 3 - H - 1
    pw = (Wo - 1) * 2 + 3 - W - 1
    assert ph >= 0 and pw >= 0
    xp = jnp.pad(x, ((0, 0), (1, ph), (1, pw), (0, 0)), constant_values=-jnp.inf)
    vals = []
    for kh in range(3):
        for kw in range(3):
            vals.append(xp[:, kh:kh + 2 * (Ho - 1) + 1:2,
                           kw:kw + 2 * (Wo - 1) + 1:2, :])
    return jnp.max(jnp.stack(vals, axis=0), axis=0)


def _resize_axis_weights(in_size, out_size):
    # nn.Upsample(mode='bilinear', align_corners=False) source index convention.
    scale = in_size / out_size
    i = jnp.arange(out_size, dtype=jnp.float32)
    src = jnp.maximum((i + 0.5) * scale - 0.5, 0.0)
    i0 = jnp.clip(jnp.floor(src).astype(jnp.int32), 0, in_size - 1)
    i1 = jnp.minimum(i0 + 1, in_size - 1)
    w = src - i0.astype(jnp.float32)
    return i0, i1, w


def bilinear_resize_nhwc(x, out_h, out_w):
    h0, h1, wh = _resize_axis_weights(x.shape[1], out_h)
    w0, w1, ww = _resize_axis_weights(x.shape[2], out_w)
    top = jnp.take(x, h0, axis=1)
    bot = jnp.take(x, h1, axis=1)
    xh = top * (1.0 - wh)[None, :, None, None] + bot * wh[None, :, None, None]
    left = jnp.take(xh, w0, axis=2)
    right = jnp.take(xh, w1, axis=2)
    return left * (1.0 - ww)[None, None, :, None] + right * ww[None, None, :, None]


# --------------------------- Model definition --------------------------------

LAYER_CFG = [  # (planes, blocks, stride, dilation) — ResNet-101: layers [3, 4, 23, 3]
    (64, 3, 1, 1),
    (128, 4, 2, 1),
    (256, 23, 1, 2),
    (512, 3, 1, 4),
]
EXPANSION = 4  # Bottleneck block (the DeepLab block: stride on the 1x1 conv1)


def init_params(key, num_classes):
    counter = [0]

    def conv_w(kh, kw, cin, cout):
        counter[0] += 1
        k = jax.random.fold_in(key, counter[0])
        w = 0.01 * jax.random.normal(k, (kh, kw, cin, cout), jnp.float32)
        return w.astype(jnp.bfloat16)            # bf16 weights: half the weight DMA

    params = {"conv1": conv_w(7, 7, 3, 64)}
    inplanes = 64
    layers = []
    for planes, blocks, stride, dilation in LAYER_CFG:
        blist = []
        for i in range(blocks):
            cin = inplanes if i == 0 else planes * EXPANSION
            blk = {
                "w1": conv_w(1, 1, cin, planes),
                "w2": conv_w(3, 3, planes, planes),
                "w3": conv_w(1, 1, planes, planes * EXPANSION),
            }
            if i == 0:  # downsample branch exists for the first block of every layer
                blk["wd"] = conv_w(1, 1, cin, planes * EXPANSION)
            blist.append(blk)
        layers.append(blist)
        inplanes = planes * EXPANSION
    params["layers"] = layers
    params["cls_w"] = [conv_w(3, 3, 2048, num_classes) for _ in range(4)]
    params["cls_b"] = [jnp.zeros((num_classes,), jnp.float32) for _ in range(4)]
    return params


def bottleneck(x, blk, stride, dilation):
    out = relu(batchnorm(conv2d(x, blk["w1"], stride=stride)))
    out = relu(batchnorm(conv2d(out, blk["w2"], stride=1,
                                padding=dilation, dilation=dilation)))
    out = batchnorm(conv2d(out, blk["w3"]))
    if "wd" in blk:
        residual = batchnorm(conv2d(x, blk["wd"], stride=stride))
    else:
        residual = x
    return relu(out + residual)


def classifier_module(x, ws, bs, dilations=(6, 12, 18, 24)):
    N, H, W, _ = x.shape
    nc = ws[0].shape[-1]
    if H <= min(dilations) and W <= min(dilations):
        # Every non-center tap of every branch reads only zero padding, so each branch
        # reduces to its 1x1 center tap over x itself.  Fuse the four branches into one
        # matmul (weights concatenated along Cout) and sum the branch outputs in f32 —
        # same values as the four separate f32 matmuls summed, but x is read once.
        w_c = jnp.concatenate([w[1:2, 1:2] for w in ws], axis=-1)   # (1,1,2048,4*nc)
        b_c = jnp.concatenate(bs, axis=0)                           # (4*nc,)
        out = conv2d(x, w_c, bias=b_c)
        return out.reshape(N, H, W, 4, nc).sum(axis=3)
    out = conv2d(x, ws[0], bias=bs[0], padding=dilations[0], dilation=dilations[0])
    for i in range(1, 4):
        out = out + conv2d(x, ws[i], bias=bs[i],
                           padding=dilations[i], dilation=dilations[i])
    return out


def resnet_forward(x, params):
    # x: NHWC
    x = conv2d(x, params["conv1"], stride=2, padding=3)
    x = relu(batchnorm(x))
    x = maxpool_3x3_s2_p1_ceil(x)
    for layer_params, (planes, blocks, stride, dilation) in zip(params["layers"], LAYER_CFG):
        for i, blk in enumerate(layer_params):
            x = bottleneck(x, blk, stride if i == 0 else 1, dilation)
    embedding = x
    logits = classifier_module(x, params["cls_w"], params["cls_b"])
    return logits, embedding


def ms_deeplab_forward(x_nchw, params):
    """MS_Deeplab.forward — inputs/outputs in NCHW (PyTorch convention)."""
    x = jnp.transpose(x_nchw, (0, 2, 3, 1)).astype(jnp.float32)  # NCHW -> NHWC
    # TODO(synk): reference MS_Deeplab.forward calls .size()/Upsample on the
    # (logits, embedding) tuple returned by ResNet.forward (would raise in PyTorch);
    # we follow the evident intent and use the classifier logits.
    output, _ = resnet_forward(x, params)
    output_size = output.shape[1]
    input_size = x_nchw.shape[2]
    s75 = int(input_size * 0.75) + 1
    s5 = int(input_size * 0.5) + 1

    x75 = bilinear_resize_nhwc(x, s75, s75)
    out75, _ = resnet_forward(x75, params)
    out75 = bilinear_resize_nhwc(out75, output_size, output_size)

    x5 = bilinear_resize_nhwc(x, s5, s5)
    out5, _ = resnet_forward(x5, params)
    out5 = bilinear_resize_nhwc(out5, output_size, output_size)

    out_max = elementwise_max3(output, out75, out5)

    to_nchw = lambda t: jnp.transpose(t, (0, 3, 1, 2))
    return [to_nchw(output), to_nchw(out75), to_nchw(out5), to_nchw(out_max)]


# --------------------------- Main ---------------------------------------------

if __name__ == "__main__":
    num_classes = 8
    key = jax.random.PRNGKey(0)
    pkey, xkey = jax.random.split(key)
    params = init_params(pkey, num_classes)

    # Small NCHW input consistent with the module (3-channel image).
    x = jax.random.normal(xkey, (2, 3, 33, 33), jnp.float32)

    outs = ms_deeplab_forward(x, params)
    outs = jax.block_until_ready(outs)

    expected = (2, num_classes, 5, 5)   # 33 -> /8 stride -> 5x5 logits
    assert all(o.shape == expected for o in outs), [o.shape for o in outs]
    assert all(bool(jnp.all(jnp.isfinite(o))) for o in outs)
    print("KERNEL_OK")
</pallas_src>

<mosaic_0001>
module attributes {stable_mosaic.version = 11 : i64} {
  func.func @_mm_bias_kernel(%arg0: i32, %arg1: i32, %arg2: i32, %arg3: memref<256x256xbf16, #tpu.memory_space<vmem>>, %arg4: memref<256x128xbf16, #tpu.memory_space<vmem>>, %arg5: memref<1x128xf32, #tpu.memory_space<vmem>>, %arg6: memref<256x128xf32, #tpu.memory_space<vmem>>) attributes {dimension_semantics = [#tpu.dimension_semantics<parallel>, #tpu.dimension_semantics<parallel>, #tpu.dimension_semantics<arbitrary>], iteration_bounds = array<i64: 3, 1, 1>, scalar_prefetch = 0 : i64, scratch_operands = 0 : i64, tpu.core_type = #tpu.core_type<tc>, window_params = [{transform_indices = @transform_0, window_bounds = array<i64: 256, 256>}, {transform_indices = @transform_1, window_bounds = array<i64: 256, 128>}, {transform_indices = @transform_2, window_bounds = array<i64: 1, 128>}, {transform_indices = @transform_3, window_bounds = array<i64: 256, 128>}]} {
    %c0_i32 = arith.constant 0 : i32
    %0 = arith.cmpi eq, %arg2, %c0_i32 : i32
    %1 = arith.extui %0 : i1 to i32
    %c0_i32_0 = arith.constant 0 : i32
    %2 = arith.cmpi ne, %1, %c0_i32_0 : i32
    scf.if %2 {
      %c0_8 = arith.constant 0 : index
      %c0_9 = arith.constant 0 : index
      %9 = vector.load %arg5[%c0_8, %c0_9] : memref<1x128xf32, #tpu.memory_space<vmem>>, vector<1x128xf32>
      %10 = vector.shape_cast %9 : vector<1x128xf32> to vector<1x128xf32>
      %11 = vector.broadcast %10 : vector<1x128xf32> to vector<256x128xf32>
      %c0_10 = arith.constant 0 : index
      %c0_11 = arith.constant 0 : index
      %12 = vector.load %arg6[%c0_10, %c0_11] : memref<256x128xf32, #tpu.memory_space<vmem>>, vector<256x128xf32>
      tpu.vector_store %arg6[%c0_10, %c0_11], %11 {strides = array<i32>} : memref<256x128xf32, #tpu.memory_space<vmem>>, vector<256x128xf32>,
    } else {
    }
    %c0 = arith.constant 0 : index
    %c0_1 = arith.constant 0 : index
    %3 = vector.load %arg3[%c0, %c0_1] : memref<256x256xbf16, #tpu.memory_space<vmem>>, vector<256x256xbf16>
    %c0_2 = arith.constant 0 : index
    %c0_3 = arith.constant 0 : index
    %4 = vector.load %arg6[%c0_2, %c0_3] : memref<256x128xf32, #tpu.memory_space<vmem>>, vector<256x128xf32>
    %c0_4 = arith.constant 0 : index
    %c0_5 = arith.constant 0 : index
    %5 = vector.load %arg4[%c0_4, %c0_5] : memref<256x128xbf16, #tpu.memory_space<vmem>>, vector<256x128xbf16>
    %cst = arith.constant dense<0.000000e+00> : vector<256x128xf32>
    %6 = tpu.matmul %3, %5, %cst {dimension_numbers = #tpu.dot_dimension_numbers<[1], [0], [0], [1], [0, 0, 1, 1], [], []>} : vector<256x256xbf16>, vector<256x128xbf16>, vector<256x128xf32> -> vector<256x128xf32>
    %7 = arith.addf %4, %6 : vector<256x128xf32>
    %c0_6 = arith.constant 0 : index
    %c0_7 = arith.constant 0 : index
    %8 = vector.load %arg6[%c0_6, %c0_7] : memref<256x128xf32, #tpu.memory_space<vmem>>, vector<256x128xf32>
    tpu.vector_store %arg6[%c0_6, %c0_7], %7 {strides = array<i32>} : memref<256x128xf32, #tpu.memory_space<vmem>>, vector<256x128xf32>,
    return
  }
  func.func @transform_0(%arg0: i32, %arg1: i32, %arg2: i32) -> (i32, i32) {
    %c0_i32 = arith.constant 0 : i32
    return %arg0, %arg2 : i32, i32
  }
  func.func @transform_1(%arg0: i32, %arg1: i32, %arg2: i32) -> (i32, i32) {
    %c0_i32 = arith.constant 0 : i32
    return %arg2, %arg1 : i32, i32
  }
  func.func @transform_2(%arg0: i32, %arg1: i32, %arg2: i32) -> (i32, i32) {
    %c0_i32 = arith.constant 0 : i32
    %c0_i32_0 = arith.constant 0 : i32
    return %c0_i32, %arg1 : i32, i32
  }
  func.func @transform_3(%arg0: i32, %arg1: i32, %arg2: i32) -> (i32, i32) {
    %c0_i32 = arith.constant 0 : i32
    return %arg0, %arg1 : i32, i32
  }
}

</mosaic_0001>

<llo_original>
// kernel: tpu_custom_call.1
$region0: #{tpu_custom_call.1}
  #allocation0 [shape = 'u32[]', space=smem, size = 0x4, offset = 0x4, fixed_abs, tag = 'smem constant byte address 0x4 - core index']
  #allocation1 [shape = 'u32[72,128]{1,0:T(1,128)}', space=vmem, size = 0x9000, scoped, tag = 'internal scratch']
  %s0 = inlined_call_operand.hbm [shape: bf16[640,256], index: 0, kind: input, shape index: {}]
  %s1 = inlined_call_operand.vmem [shape: bf16[256,64], index: 1, kind: input, shape index: {}]
  %s2 = inlined_call_operand.vmem [shape: f32[1,64], index: 2, kind: input, shape index: {}]
  %s3 = inlined_call_operand.vmem [shape: f32[640,64], index: 3, kind: output, shape index: {}]
  %s4 = sld [smem:[#allocation0]]
  $region101: #{tpu_custom_call.1} parent=0
    _
  %s6 = ssub.s32 1, %s4
  %s7 = scalar_select 0, %s6, %s4
  $region1: #{tpu_custom_call.1} parent=0
    #allocation2 [shape = 'u8[262144]{0}', space=vmem, size = 0x40000, scoped, tag = 'input window, operand 0']
    #allocation3 [shape = 's32[2]{0}', space=sflag, size = 0x8, scoped, tag = 'scoped memory for tpu_custom_call.1']
    #allocation4 [shape = 'u8[262144]{0}', space=vmem, size = 0x40000, scoped, tag = 'output window, operand 0']
    %8 = vsyncpa [#allocation3], 0
    %s9 = scalar_lea.sflag [#allocation3], 1
    %10 = vsyncpa %s9, 0
    loop: start=0, step=1, limit=5
    $region2: #{tpu_custom_call.1} parent=1 // loop_pre_header
      _
    $region3: #{tpu_custom_call.1} parent=1 // loop_header
      %s12 = sphi 0, %s16
      %p13 = scmp.ge.s32.totalorder %s12, 5
      %s19 = sphi 0, %s38
      %s20 = sphi 0, %s34
      %s21 = sphi 0, %s30
      %s22 = sphi 0, %s19
      %s23 = sphi 0, %s20
      %s24 = sphi 0, %s21
      %s25 = sphi 0, %s22
      %s26 = sphi 0, %s23
      %s27 = sphi 0, %s24
      %s43 = sphi 0, %s45
      %s46 = sphi 0, %s43
      %s47 = sphi 0, %s46
      %s63 = sphi 0, %s47
      %s71 = sphi 0, %s73
      %s74 = sphi 0, %s71
      %s75 = sphi 0, %s74
      %s91 = sphi 0, %s75
      %s97 = sphi 0, %s99
      %s100 = sphi 0, %s97
      %s101 = sphi 0, %s100
      %s117 = sphi 0, %s101
      %s125 = sphi 0, %s127
      %s128 = sphi 0, %s125
      %s129 = sphi 0, %s128
      %s145 = sphi 0, %s129
    $region4: #{tpu_custom_call.1} parent=1 // loop_header_branch
      %15 = sbr.rel (%p13) target = $region8
    $region5: #{tpu_custom_call.1} parent=1 // loop_body
      %s17 = ssub.s32 %s12, 1
      %s18 = ssub.s32 %s12, 2
      %s28 = sadd.s32 1, %s21
      %p29 = scmp.ge.s32.totalorder %s28, 1
      %s30 = scalar_select %p29, 0, %s28
      %s31 = sadd.s32 1, %s20
      %s32 = scalar_select %p29, %s31, %s20
      %p33 = scmp.ge.s32.totalorder %s32, 1
      %s34 = scalar_select %p33, 0, %s32
      %s35 = sadd.s32 1, %s19
      %s36 = scalar_select %p33, %s35, %s19
      %p37 = scmp.ge.s32.totalorder %s36, 3
      %s38 = scalar_select %p37, 0, %s36
      %s39 = ssub.s32 %s19, %s38
      %s40 = ssub.s32 %s21, %s30
      %s41 = sor.u32 %s39, %s40
      %p42 = scmp.eq.s32.totalorder %s41, 0
      %s44 = sadd.s32 %s43, 1
      %s45 = scalar_select %p42, %s43, %s44
      %p48 = pneg %p42
      %p49 = scmp.eq.s32.totalorder %s12, 2
      %p50 = por %p48, %p49
      %p51 = scmp.ne.s32.totalorder %s43, %s46
      %p52 = scmp.eq.s32.totalorder %s12, 0
      %p53 = por %p51, %p52
      %p54 = scmp.ne.s32.totalorder %s43, %s46
      %p55 = scmp.eq.s32.totalorder %s17, 2
      %p56 = por %p54, %p55
      %p57 = scmp.ne.s32.totalorder %s46, %s47
      %p58 = scmp.eq.s32.totalorder %s17, 0
      %p59 = por %p57, %p58
      %p60 = scmp.ne.s32.totalorder %s46, %s47
      %p61 = scmp.eq.s32.totalorder %s18, 2
      %p62 = por %p60, %p61
      %p64 = scmp.ne.s32.totalorder %s47, %s63
      %p65 = scmp.eq.s32.totalorder %s18, 0
      %p66 = por %p64, %p65
      %s67 = ssub.s32 %s21, %s30
      %s68 = ssub.s32 %s20, %s34
      %s69 = sor.u32 %s67, %s68
      %p70 = scmp.eq.s32.totalorder %s69, 0
      %s72 = sadd.s32 %s71, 1
      %s73 = scalar_select %p70, %s71, %s72
      %p76 = pneg %p70
      %p77 = scmp.eq.s32.totalorder %s12, 2
      %p78 = por %p76, %p77
      %p79 = scmp.ne.s32.totalorder %s71, %s74
      %p80 = scmp.eq.s32.totalorder %s12, 0
      %p81 = por %p79, %p80
      %p82 = scmp.ne.s32.totalorder %s71, %s74
      %p83 = scmp.eq.s32.totalorder %s17, 2
      %p84 = por %p82, %p83
      %p85 = scmp.ne.s32.totalorder %s74, %s75
      %p86 = scmp.eq.s32.totalorder %s17, 0
      %p87 = por %p85, %p86
      %p88 = scmp.ne.s32.totalorder %s74, %s75
      %p89 = scmp.eq.s32.totalorder %s18, 2
      %p90 = por %p88, %p89
      %p92 = scmp.ne.s32.totalorder %s75, %s91
      %p93 = scmp.eq.s32.totalorder %s18, 0
      %p94 = por %p92, %p93
      %s95 = ssub.s32 %s20, %s34
      %p96 = scmp.eq.s32.totalorder %s95, 0
      %s98 = sadd.s32 %s97, 1
      %s99 = scalar_select %p96, %s97, %s98
      %p102 = pneg %p96
      %p103 = scmp.eq.s32.totalorder %s12, 2
      %p104 = por %p102, %p103
      %p105 = scmp.ne.s32.totalorder %s97, %s100
      %p106 = scmp.eq.s32.totalorder %s12, 0
      %p107 = por %p105, %p106
      %p108 = scmp.ne.s32.totalorder %s97, %s100
      %p109 = scmp.eq.s32.totalorder %s17, 2
      %p110 = por %p108, %p109
      %p111 = scmp.ne.s32.totalorder %s100, %s101
      %p112 = scmp.eq.s32.totalorder %s17, 0
      %p113 = por %p111, %p112
      %p114 = scmp.ne.s32.totalorder %s100, %s101
      %p115 = scmp.eq.s32.totalorder %s18, 2
      %p116 = por %p114, %p115
      %p118 = scmp.ne.s32.totalorder %s101, %s117
      %p119 = scmp.eq.s32.totalorder %s18, 0
      %p120 = por %p118, %p119
      %s121 = ssub.s32 %s19, %s38
      %s122 = ssub.s32 %s20, %s34
      %s123 = sor.u32 %s121, %s122
      %p124 = scmp.eq.s32.totalorder %s123, 0
      %s126 = sadd.s32 %s125, 1
      %s127 = scalar_select %p124, %s125, %s126
      %p130 = pneg %p124
      %p131 = scmp.eq.s32.totalorder %s12, 2
      %p132 = por %p130, %p131
      %p133 = scmp.ne.s32.totalorder %s125, %s128
      %p134 = scmp.eq.s32.totalorder %s12, 0
      %p135 = por %p133, %p134
      %p136 = scmp.ne.s32.totalorder %s125, %s128
      %p137 = scmp.eq.s32.totalorder %s17, 2
      %p138 = por %p136, %p137
      %p139 = scmp.ne.s32.totalorder %s128, %s129
      %p140 = scmp.eq.s32.totalorder %s17, 0
      %p141 = por %p139, %p140
      %p142 = scmp.ne.s32.totalorder %s128, %s129
      %p143 = scmp.eq.s32.totalorder %s18, 2
      %p144 = por %p142, %p143
      %p146 = scmp.ne.s32.totalorder %s129, %s145
      %p147 = scmp.eq.s32.totalorder %s18, 0
      %p148 = por %p146, %p147
      %p149 = scmp.le.s32.totalorder 1, %s12
      %p150 = scmp.lt.s32.totalorder %s12, 4
      %p151 = pnand %p149, %p150
      %p152 = pneg %p151
      // Predicated region
      $region9: #{tpu_custom_call.1} parent=5 // pred_check
        _
      $region10: #{tpu_custom_call.1} parent=5 // pred_check_branch
        %154 = sbr.rel (%p151) target = $region12
      $region11: #{tpu_custom_call.1} parent=5 // pred_region
        %s155 = ssub.s32 %s12, 1
        // Predicated region
        $region13: #{tpu_custom_call.1} parent=11 // pred_check
          %p156 = pneg %p87
        $region14: #{tpu_custom_call.1} parent=11 // pred_check_branch
          %158 = sbr.rel (%p156) target = $region16
        $region15: #{tpu_custom_call.1} parent=11 // pred_region
          %s159 = smul.u32 32, %s24
          %p160 = scmp.lt.s32.totalorder %s159, 31
          %s161 = scalar_select %p160, %s159, 31
          %p162 = scmp.lt.s32.totalorder %s23, 0
          %s163 = scalar_select %p162, %s23, 0
          %s164 = sadd.s32 %s163, %s161
          %s165 = smul.addr %s164, 4
          %s166 = scalar_lea.vmem %s1, %s165
          %s167 = smul.u32 32, %s24
        $region16: #{tpu_custom_call.1} parent=11 // pred_fallthru
          _
        // Predicated region
        $region17: #{tpu_custom_call.1} parent=11 // pred_check
          %p168 = pneg %p113
        $region18: #{tpu_custom_call.1} parent=11 // pred_check_branch
          %170 = sbr.rel (%p168) target = $region20
        $region19: #{tpu_custom_call.1} parent=11 // pred_region
          %p171 = scmp.lt.s32.totalorder %s23, 0
          %s172 = scalar_select %p171, %s23, 0
          %s173 = scalar_lea.vmem %s2, %s172
        $region20: #{tpu_custom_call.1} parent=11 // pred_fallthru
          _
      $region12: #{tpu_custom_call.1} parent=5 // pred_fallthru
        _
      %p174 = scmp.lt.s32.totalorder %s12, 3
      // Predicated region
      $region21: #{tpu_custom_call.1} parent=5 // pred_check
        %p175 = pneg %p174
      $region22: #{tpu_custom_call.1} parent=5 // pred_check_branch
        %177 = sbr.rel (%p175) target = $region24
      $region23: #{tpu_custom_call.1} parent=5 // pred_region
        // Predicated region
        $region25: #{tpu_custom_call.1} parent=23 // pred_check
          %p178 = pneg %p53
        $region26: #{tpu_custom_call.1} parent=23 // pred_check_branch
          %180 = sbr.rel (%p178) target = $region28
        $region27: #{tpu_custom_call.1} parent=23 // pred_region
          %s181 = sand.u32 %s43, 1
          %s182 = scalar_lea.sflag [#allocation3], %s181
          %s183 = sand.u32 %s43, 1
          %s184 = smul.addr %s183, 256
          %s185 = scalar_lea.vmem [#allocation2], %s184
          %s186 = smul.u32 32, %s19
          %s187 = smul.u32 2, %s21
          %s188 = ssub.s32 80, %s186
          %p189 = scmp.lt.s32.totalorder %s188, 32
          %s190 = scalar_select %p189, %s188, 32
          %s191 = smul.u32 4, %s190
          %s192 = smul.u32 %s191, 2
          %s193 = ssub.s32 256, %s192
          %s194 = sshll.u32 %s193, 4
          %195 = vsyncadd %s182, %s194
          %p196 = scmp.ne.s32.totalorder 0, %s192
          %s197 = smul.addr %s186, 2
          %s198 = sadd.s32 %s187, %s197
          %s199 = smul.addr %s198, 4
          %s200 = scalar_lea.hbm %s0, %s199
          %s201 = smul.u32 8, %s190
          %s202 = sshll.u32 %s200, 4
          %s203 = int_to_ptr.hbm [resolvable:$true] %s202
          %s204 = sshll.u32 %s185, 4
          %s205 = int_to_ptr.vmem [resolvable:$true] %s204
          %s206 = sshll.u32 %s201, 4
          %210 = dma.hbm_to_vmem [thread:$0]  (%p196), %s203, %s206, %s205, %s182, 128, 128, 8
        $region28: #{tpu_custom_call.1} parent=23 // pred_fallthru
          _
      $region24: #{tpu_custom_call.1} parent=5 // pred_fallthru
        _
      %p211 = scmp.le.s32.totalorder 1, %s12
      %p212 = scmp.lt.s32.totalorder %s12, 4
      %p213 = pnand %p211, %p212
      %p214 = pneg %p213
      // Predicated region
      $region29: #{tpu_custom_call.1} parent=5 // pred_check
        _
      $region30: #{tpu_custom_call.1} parent=5 // pred_check_branch
        %216 = sbr.rel (%p213) target = $region32
      $region31: #{tpu_custom_call.1} parent=5 // pred_region
        %s217 = ssub.s32 %s12, 1
        %s218 = sand.u32 %s46, 1
        %s219 = scalar_lea.sflag [#allocation3], %s218
        %s220 = sand.u32 %s46, 1
        %s221 = smul.addr %s220, 256
        %s222 = scalar_lea.vmem [#allocation2], %s221
        // Predicated region
        $region33: #{tpu_custom_call.1} parent=31 // pred_check
          %p223 = pneg %p59
        $region34: #{tpu_custom_call.1} parent=31 // pred_check_branch
          %225 = sbr.rel (%p223) target = $region36
        $region35: #{tpu_custom_call.1} parent=31 // pred_region
          %227 = dma.done %s219, 4096
        $region36: #{tpu_custom_call.1} parent=31 // pred_fallthru
          _
        %s228 = sand.u32 %s46, 1
        %s229 = scalar_lea.sflag [#allocation3], %s228
        %s230 = sand.u32 %s46, 1
        %s231 = smul.addr %s230, 256
        %s232 = scalar_lea.vmem [#allocation2], %s231
        %p233 = pneg %p59
        %p234 = pneg %p56
        %s235 = smul.u32 32, %s24
        %p236 = scmp.lt.s32.totalorder %s235, 31
        %s237 = scalar_select %p236, %s235, 31
        %p238 = scmp.lt.s32.totalorder %s23, 0
        %s239 = scalar_select %p238, %s23, 0
        %s240 = sadd.s32 %s239, %s237
        %s241 = smul.addr %s240, 4
        %s242 = scalar_lea.vmem %s1, %s241
        %p243 = pneg %p87
        %p244 = pneg %p84
        %p245 = scmp.lt.s32.totalorder %s23, 0
        %s246 = scalar_select %p245, %s23, 0
        %s247 = scalar_lea.vmem %s2, %s246
        %p248 = pneg %p113
        %p249 = pneg %p110
        %p250 = pneg %p141
        %p251 = pneg %p138
        %s252 = sand.u32 %s128, 1
        %s253 = sand.u32 %s128, 1
        %s254 = smul.addr %s253, 256
        %s255 = scalar_lea.vmem [#allocation4], %s254
        %s256 = smul.u32 32, %s22
        %s257 = smul.u32 2, %s24
        %s258 = ssub.s32 80, %s256
        %p259 = scmp.lt.s32.totalorder %s258, 32
        %s260 = scalar_select %p259, %s258, 32
        %s261 = smul.u32 4, %s260
        %s262 = smul.u32 %s261, 2
        %s263 = smul.u32 32, %s24
        %p264 = scmp.lt.s32.totalorder %s263, 31
        %s265 = scalar_select %p264, %s263, 31
        %p266 = scmp.lt.s32.totalorder %s23, 0
        %s267 = scalar_select %p266, %s23, 0
        %s268 = sadd.s32 %s267, %s265
        %s269 = smul.addr %s268, 4
        %s270 = scalar_lea.vmem %s1, %s269
        %s271 = smul.u32 32, %s24
        %p272 = scmp.lt.s32.totalorder %s23, 0
        %s273 = scalar_select %p272, %s23, 0
        %s274 = scalar_lea.vmem %s2, %s273
        %s275 = smul.u32 32, %s22
        %s276 = ssub.s32 80, %s275
        %p277 = scmp.lt.s32.totalorder %s276, 32
        %s278 = scalar_select %p277, %s276, 32
        %s279 = smul.u32 8, %s278
        %p280 = scmp.eq.s32.totalorder %s24, 0
        // Predicated region
        $region37: #{tpu_custom_call.1} parent=31 // pred_check
          %p281 = pneg %p280
        $region38: #{tpu_custom_call.1} parent=31 // pred_check_branch
          %283 = sbr.rel (%p281) target = $region40
        $region39: #{tpu_custom_call.1} parent=31 // pred_region
          %v284 = vld [vmem:[%s274] sm:$0x1]
          %v286 = vperm.slane %v284, 0
          %288 = vst [vmem:[%s255] sm:$0xff] %v286
          %289 = vst [vmem:[%s255 + $0x8] sm:$0xff] %v286
          %290 = vst [vmem:[%s255 + $0x10] sm:$0xff] %v286
          %291 = vst [vmem:[%s255 + $0x18] sm:$0xff] %v286
          %292 = vst [vmem:[%s255 + $0x20] sm:$0xff] %v286
          %293 = vst [vmem:[%s255 + $0x28] sm:$0xff] %v286
          %294 = vst [vmem:[%s255 + $0x30] sm:$0xff] %v286
          %295 = vst [vmem:[%s255 + $0x38] sm:$0xff] %v286
          %296 = vst [vmem:[%s255 + $0x40] sm:$0xff] %v286
          %297 = vst [vmem:[%s255 + $0x48] sm:$0xff] %v286
          %298 = vst [vmem:[%s255 + $0x50] sm:$0xff] %v286
          %299 = vst [vmem:[%s255 + $0x58] sm:$0xff] %v286
          %300 = vst [vmem:[%s255 + $0x60] sm:$0xff] %v286
          %301 = vst [vmem:[%s255 + $0x68] sm:$0xff] %v286
          %302 = vst [vmem:[%s255 + $0x70] sm:$0xff] %v286
          %303 = vst [vmem:[%s255 + $0x78] sm:$0xff] %v286
          %304 = vst [vmem:[%s255 + $0x80] sm:$0xff] %v286
          %305 = vst [vmem:[%s255 + $0x88] sm:$0xff] %v286
          %306 = vst [vmem:[%s255 + $0x90] sm:$0xff] %v286
          %307 = vst [vmem:[%s255 + $0x98] sm:$0xff] %v286
          %308 = vst [vmem:[%s255 + $0xa0] sm:$0xff] %v286
          %309 = vst [vmem:[%s255 + $0xa8] sm:$0xff] %v286
          %310 = vst [vmem:[%s255 + $0xb0] sm:$0xff] %v286
          %311 = vst [vmem:[%s255 + $0xb8] sm:$0xff] %v286
          %312 = vst [vmem:[%s255 + $0xc0] sm:$0xff] %v286
          %313 = vst [vmem:[%s255 + $0xc8] sm:$0xff] %v286
          %314 = vst [vmem:[%s255 + $0xd0] sm:$0xff] %v286
          %315 = vst [vmem:[%s255 + $0xd8] sm:$0xff] %v286
          %316 = vst [vmem:[%s255 + $0xe0] sm:$0xff] %v286
          %317 = vst [vmem:[%s255 + $0xe8] sm:$0xff] %v286
          %318 = vst [vmem:[%s255 + $0xf0] sm:$0xff] %v286
          %319 = vst [vmem:[%s255 + $0xf8] sm:$0xff] %v286
        $region40: #{tpu_custom_call.1} parent=31 // pred_fallthru
          _
        %v320 = vld [vmem:[%s222] sm:$0xff]
        %v321 = vld [vmem:[%s222 + $0x8] sm:$0xff]
        %v322 = vld [vmem:[%s222 + $0x10] sm:$0xff]
        %v323 = vld [vmem:[%s222 + $0x18] sm:$0xff]
        %v324 = vld [vmem:[%s222 + $0x20] sm:$0xff]
        %v325 = vld [vmem:[%s222 + $0x28] sm:$0xff]
        %v326 = vld [vmem:[%s222 + $0x30] sm:$0xff]
        %v327 = vld [vmem:[%s222 + $0x38] sm:$0xff]
        %v328 = vld [vmem:[%s222 + $0x40] sm:$0xff]
        %v329 = vld [vmem:[%s222 + $0x48] sm:$0xff]
        %v330 = vld [vmem:[%s222 + $0x50] sm:$0xff]
        %v331 = vld [vmem:[%s222 + $0x58] sm:$0xff]
        %v332 = vld [vmem:[%s222 + $0x60] sm:$0xff]
        %v333 = vld [vmem:[%s222 + $0x68] sm:$0xff]
        %v334 = vld [vmem:[%s222 + $0x70] sm:$0xff]
        %v335 = vld [vmem:[%s222 + $0x78] sm:$0xff]
        %v336 = vld [vmem:[%s222 + $0x80] sm:$0xff]
        %v337 = vld [vmem:[%s222 + $0x88] sm:$0xff]
        %v338 = vld [vmem:[%s222 + $0x90] sm:$0xff]
        %v339 = vld [vmem:[%s222 + $0x98] sm:$0xff]
        %v340 = vld [vmem:[%s222 + $0xa0] sm:$0xff]
        %v341 = vld [vmem:[%s222 + $0xa8] sm:$0xff]
        %v342 = vld [vmem:[%s222 + $0xb0] sm:$0xff]
        %v343 = vld [vmem:[%s222 + $0xb8] sm:$0xff]
        %v344 = vld [vmem:[%s222 + $0xc0] sm:$0xff]
        %v345 = vld [vmem:[%s222 + $0xc8] sm:$0xff]
        %v346 = vld [vmem:[%s222 + $0xd0] sm:$0xff]
        %v347 = vld [vmem:[%s222 + $0xd8] sm:$0xff]
        %v348 = vld [vmem:[%s222 + $0xe0] sm:$0xff]
        %v349 = vld [vmem:[%s222 + $0xe8] sm:$0xff]
        %v350 = vld [vmem:[%s222 + $0xf0] sm:$0xff]
        %v351 = vld [vmem:[%s222 + $0xf8] sm:$0xff]
        %v352 = vld [vmem:[%s255] sm:$0xff]
        %v353 = vld [vmem:[%s255 + $0x8] sm:$0xff]
        %v354 = vld [vmem:[%s255 + $0x10] sm:$0xff]
        %v355 = vld [vmem:[%s255 + $0x18] sm:$0xff]
        %v356 = vld [vmem:[%s255 + $0x20] sm:$0xff]
        %v357 = vld [vmem:[%s255 + $0x28] sm:$0xff]
        %v358 = vld [vmem:[%s255 + $0x30] sm:$0xff]
        %v359 = vld [vmem:[%s255 + $0x38] sm:$0xff]
        %v360 = vld [vmem:[%s255 + $0x40] sm:$0xff]
        %v361 = vld [vmem:[%s255 + $0x48] sm:$0xff]
        %v362 = vld [vmem:[%s255 + $0x50] sm:$0xff]
        %v363 = vld [vmem:[%s255 + $0x58] sm:$0xff]
        %v364 = vld [vmem:[%s255 + $0x60] sm:$0xff]
        %v365 = vld [vmem:[%s255 + $0x68] sm:$0xff]
        %v366 = vld [vmem:[%s255 + $0x70] sm:$0xff]
        %v367 = vld [vmem:[%s255 + $0x78] sm:$0xff]
        %v368 = vld [vmem:[%s255 + $0x80] sm:$0xff]
        %v369 = vld [vmem:[%s255 + $0x88] sm:$0xff]
        %v370 = vld [vmem:[%s255 + $0x90] sm:$0xff]
        %v371 = vld [vmem:[%s255 + $0x98] sm:$0xff]
        %v372 = vld [vmem:[%s255 + $0xa0] sm:$0xff]
        %v373 = vld [vmem:[%s255 + $0xa8] sm:$0xff]
        %v374 = vld [vmem:[%s255 + $0xb0] sm:$0xff]
        %v375 = vld [vmem:[%s255 + $0xb8] sm:$0xff]
        %v376 = vld [vmem:[%s255 + $0xc0] sm:$0xff]
        %v377 = vld [vmem:[%s255 + $0xc8] sm:$0xff]
        %v378 = vld [vmem:[%s255 + $0xd0] sm:$0xff]
        %v379 = vld [vmem:[%s255 + $0xd8] sm:$0xff]
        %v380 = vld [vmem:[%s255 + $0xe0] sm:$0xff]
        %v381 = vld [vmem:[%s255 + $0xe8] sm:$0xff]
        %v382 = vld [vmem:[%s255 + $0xf0] sm:$0xff]
        %v383 = vld [vmem:[%s255 + $0xf8] sm:$0xff]
        %v384 = vld [vmem:[%s270] sm:$0xf]
        %v385 = vld [vmem:[%s270 + $0x4] sm:$0xf]
        %v386 = vld [vmem:[%s270 + $0x8] sm:$0xf]
        %v387 = vld [vmem:[%s270 + $0xc] sm:$0xf]
        %v388 = vld [vmem:[%s270 + $0x10] sm:$0xf]
        %v389 = vld [vmem:[%s270 + $0x14] sm:$0xf]
        %v390 = vld [vmem:[%s270 + $0x18] sm:$0xf]
        %v391 = vld [vmem:[%s270 + $0x1c] sm:$0xf]
        %v392 = vld [vmem:[%s270 + $0x20] sm:$0xf]
        %v393 = vld [vmem:[%s270 + $0x24] sm:$0xf]
        %v394 = vld [vmem:[%s270 + $0x28] sm:$0xf]
        %v395 = vld [vmem:[%s270 + $0x2c] sm:$0xf]
        %v396 = vld [vmem:[%s270 + $0x30] sm:$0xf]
        %v397 = vld [vmem:[%s270 + $0x34] sm:$0xf]
        %v398 = vld [vmem:[%s270 + $0x38] sm:$0xf]
        %v399 = vld [vmem:[%s270 + $0x3c] sm:$0xf]
        %v400 = vld [vmem:[%s270 + $0x40] sm:$0xf]
        %v401 = vld [vmem:[%s270 + $0x44] sm:$0xf]
        %v402 = vld [vmem:[%s270 + $0x48] sm:$0xf]
        %v403 = vld [vmem:[%s270 + $0x4c] sm:$0xf]
        %v404 = vld [vmem:[%s270 + $0x50] sm:$0xf]
        %v405 = vld [vmem:[%s270 + $0x54] sm:$0xf]
        %v406 = vld [vmem:[%s270 + $0x58] sm:$0xf]
        %v407 = vld [vmem:[%s270 + $0x5c] sm:$0xf]
        %v408 = vld [vmem:[%s270 + $0x60] sm:$0xf]
        %v409 = vld [vmem:[%s270 + $0x64] sm:$0xf]
        %v410 = vld [vmem:[%s270 + $0x68] sm:$0xf]
        %v411 = vld [vmem:[%s270 + $0x6c] sm:$0xf]
        %v412 = vld [vmem:[%s270 + $0x70] sm:$0xf]
        %v413 = vld [vmem:[%s270 + $0x74] sm:$0xf]
        %v414 = vld [vmem:[%s270 + $0x78] sm:$0xf]
        %v415 = vld [vmem:[%s270 + $0x7c] sm:$0xf]
        %v448 = vunpack.c.l.b16 %v320
        %v449 = vunpack.c.h.b16 %v320
        %v450 = vunpack.c.l.b16 %v321
        %v451 = vunpack.c.h.b16 %v321
        %v452 = vunpack.c.l.b16 %v322
        %v453 = vunpack.c.h.b16 %v322
        %v454 = vunpack.c.l.b16 %v323
        %v455 = vunpack.c.h.b16 %v323
        %v456 = vunpack.c.l.b16 %v324
        %v457 = vunpack.c.h.b16 %v324
        %v458 = vunpack.c.l.b16 %v325
        %v459 = vunpack.c.h.b16 %v325
        %v460 = vunpack.c.l.b16 %v326
        %v461 = vunpack.c.h.b16 %v326
        %v462 = vunpack.c.l.b16 %v327
        %v463 = vunpack.c.h.b16 %v327
        %v464 = vunpack.c.l.b16 %v328
        %v465 = vunpack.c.h.b16 %v328
        %v466 = vunpack.c.l.b16 %v329
        %v467 = vunpack.c.h.b16 %v329
        %v468 = vunpack.c.l.b16 %v330
        %v469 = vunpack.c.h.b16 %v330
        %v470 = vunpack.c.l.b16 %v331
        %v471 = vunpack.c.h.b16 %v331
        %v472 = vunpack.c.l.b16 %v332
        %v473 = vunpack.c.h.b16 %v332
        %v474 = vunpack.c.l.b16 %v333
        %v475 = vunpack.c.h.b16 %v333
        %v476 = vunpack.c.l.b16 %v334
        %v477 = vunpack.c.h.b16 %v334
        %v478 = vunpack.c.l.b16 %v335
        %v479 = vunpack.c.h.b16 %v335
        %v480 = vunpack.c.l.b16 %v336
        %v481 = vunpack.c.h.b16 %v336
        %v482 = vunpack.c.l.b16 %v337
        %v483 = vunpack.c.h.b16 %v337
        %v484 = vunpack.c.l.b16 %v338
        %v485 = vunpack.c.h.b16 %v338
        %v486 = vunpack.c.l.b16 %v339
        %v487 = vunpack.c.h.b16 %v339
        %v488 = vunpack.c.l.b16 %v340
        %v489 = vunpack.c.h.b16 %v340
        %v490 = vunpack.c.l.b16 %v341
        %v491 = vunpack.c.h.b16 %v341
        %v492 = vunpack.c.l.b16 %v342
        %v493 = vunpack.c.h.b16 %v342
        %v494 = vunpack.c.l.b16 %v343
        %v495 = vunpack.c.h.b16 %v343
        %v496 = vunpack.c.l.b16 %v344
        %v497 = vunpack.c.h.b16 %v344
        %v498 = vunpack.c.l.b16 %v345
        %v499 = vunpack.c.h.b16 %v345
        %v500 = vunpack.c.l.b16 %v346
        %v501 = vunpack.c.h.b16 %v346
        %v502 = vunpack.c.l.b16 %v347
        %v503 = vunpack.c.h.b16 %v347
        %v504 = vunpack.c.l.b16 %v348
        %v505 = vunpack.c.h.b16 %v348
        %v506 = vunpack.c.l.b16 %v349
        %v507 = vunpack.c.h.b16 %v349
        %v508 = vunpack.c.l.b16 %v350
        %v509 = vunpack.c.h.b16 %v350
        %v510 = vunpack.c.l.b16 %v351
        %v511 = vunpack.c.h.b16 %v351
        %v512 = vpack.c.b16 %v450, %v448
        %v513 = vpack.c.b16 %v451, %v449
        %v514 = vpack.c.b16 %v454, %v452
        %v515 = vpack.c.b16 %v455, %v453
        %v516 = vpack.c.b16 %v458, %v456
        %v517 = vpack.c.b16 %v459, %v457
        %v518 = vpack.c.b16 %v462, %v460
        %v519 = vpack.c.b16 %v463, %v461
        %v520 = vpack.c.b16 %v466, %v464
        %v521 = vpack.c.b16 %v467, %v465
        %v522 = vpack.c.b16 %v470, %v468
        %v523 = vpack.c.b16 %v471, %v469
        %v524 = vpack.c.b16 %v474, %v472
        %v525 = vpack.c.b16 %v475, %v473
        %v526 = vpack.c.b16 %v478, %v476
        %v527 = vpack.c.b16 %v479, %v477
        %v528 = vpack.c.b16 %v482, %v480
        %v529 = vpack.c.b16 %v483, %v481
        %v530 = vpack.c.b16 %v486, %v484
        %v531 = vpack.c.b16 %v487, %v485
        %v532 = vpack.c.b16 %v490, %v488
        %v533 = vpack.c.b16 %v491, %v489
        %v534 = vpack.c.b16 %v494, %v492
        %v535 = vpack.c.b16 %v495, %v493
        %v536 = vpack.c.b16 %v498, %v496
        %v537 = vpack.c.b16 %v499, %v497
        %v538 = vpack.c.b16 %v502, %v500
        %v539 = vpack.c.b16 %v503, %v501
        %v540 = vpack.c.b16 %v506, %v504
        %v541 = vpack.c.b16 %v507, %v505
        %v542 = vpack.c.b16 %v510, %v508
        %v543 = vpack.c.b16 %v511, %v509
        %v608 = vunpack.c.l.b16 %v384
        %v609 = vunpack.c.l.b16 %v385
        %v610 = vunpack.c.l.b16 %v386
        %v611 = vunpack.c.l.b16 %v387
        %v612 = vunpack.c.l.b16 %v388
        %v613 = vunpack.c.l.b16 %v389
        %v614 = vunpack.c.l.b16 %v390
        %v615 = vunpack.c.l.b16 %v391
        %v616 = vunpack.c.l.b16 %v392
        %v617 = vunpack.c.l.b16 %v393
        %v618 = vunpack.c.l.b16 %v394
        %v619 = vunpack.c.l.b16 %v395
        %v620 = vunpack.c.l.b16 %v396
        %v621 = vunpack.c.l.b16 %v397
        %v622 = vunpack.c.l.b16 %v398
        %v623 = vunpack.c.l.b16 %v399
        %v624 = vunpack.c.l.b16 %v400
        %v625 = vunpack.c.l.b16 %v401
        %v626 = vunpack.c.l.b16 %v402
        %v627 = vunpack.c.l.b16 %v403
        %v628 = vunpack.c.l.b16 %v404
        %v629 = vunpack.c.l.b16 %v405
        %v630 = vunpack.c.l.b16 %v406
        %v631 = vunpack.c.l.b16 %v407
        %v632 = vunpack.c.l.b16 %v408
        %v633 = vunpack.c.l.b16 %v409
        %v634 = vunpack.c.l.b16 %v410
        %v635 = vunpack.c.l.b16 %v411
        %v636 = vunpack.c.l.b16 %v412
        %v637 = vunpack.c.l.b16 %v413
        %v638 = vunpack.c.l.b16 %v414
        %v639 = vunpack.c.l.b16 %v415
        %v640 = vpack.c.b16 %v609, %v608
        %v641 = vpack.c.b16 %v611, %v610
        %v642 = vpack.c.b16 %v613, %v612
        %v643 = vpack.c.b16 %v615, %v614
        %v644 = vpack.c.b16 %v617, %v616
        %v645 = vpack.c.b16 %v619, %v618
        %v646 = vpack.c.b16 %v621, %v620
        %v647 = vpack.c.b16 %v623, %v622
        %v648 = vpack.c.b16 %v625, %v624
        %v649 = vpack.c.b16 %v627, %v626
        %v650 = vpack.c.b16 %v629, %v628
        %v651 = vpack.c.b16 %v631, %v630
        %v652 = vpack.c.b16 %v633, %v632
        %v653 = vpack.c.b16 %v635, %v634
        %v654 = vpack.c.b16 %v637, %v636
        %v655 = vpack.c.b16 %v639, %v638
        %672 = vmatpush.bf16.msra.mxu0 %v647
        %673 = vmatpush.bf16.msra.mxu0 %v646
        %674 = vmatpush.bf16.msra.mxu0 %v645
        %675 = vmatpush.bf16.msra.mxu0 %v644
        %676 = vmatpush.bf16.msra.mxu0 %v643
        %677 = vmatpush.bf16.msra.mxu0 %v642
        %678 = vmatpush.bf16.msra.mxu0 %v641
        %679 = vmatpush.bf16.msra.mxu0 %v640
        %680 = vmatmul.bf16.gmra.mxu0 %v512
        %v681 = vpop.f32.mrf.mxu0
        %v682 = vadd.f32 0.0, %v681
        %v683 = vpop.f32.mrf.mxu0
        %v684 = vadd.f32 0.0, %v683
        %685 = vmatmul.bf16.gmra.mxu0 %v514
        %v686 = vpop.f32.mrf.mxu0
        %v687 = vadd.f32 0.0, %v686
        %v688 = vpop.f32.mrf.mxu0
        %v689 = vadd.f32 0.0, %v688
        %690 = vmatmul.bf16.gmra.mxu0 %v516
        %v691 = vpop.f32.mrf.mxu0
        %v692 = vadd.f32 0.0, %v691
        %v693 = vpop.f32.mrf.mxu0
        %v694 = vadd.f32 0.0, %v693
        %695 = vmatmul.bf16.gmra.mxu0 %v518
        %v696 = vpop.f32.mrf.mxu0
        %v697 = vadd.f32 0.0, %v696
        %v698 = vpop.f32.mrf.mxu0
        %v699 = vadd.f32 0.0, %v698
        %700 = vmatmul.bf16.gmra.mxu0 %v520
        %v701 = vpop.f32.mrf.mxu0
        %v702 = vadd.f32 0.0, %v701
        %v703 = vpop.f32.mrf.mxu0
        %v704 = vadd.f32 0.0, %v703
        %705 = vmatmul.bf16.gmra.mxu0 %v522
        %v706 = vpop.f32.mrf.mxu0
        %v707 = vadd.f32 0.0, %v706
        %v708 = vpop.f32.mrf.mxu0
        %v709 = vadd.f32 0.0, %v708
        %710 = vmatmul.bf16.gmra.mxu0 %v524
        %v711 = vpop.f32.mrf.mxu0
        %v712 = vadd.f32 0.0, %v711
        %v713 = vpop.f32.mrf.mxu0
        %v714 = vadd.f32 0.0, %v713
        %715 = vmatmul.bf16.gmra.mxu0 %v526
        %v716 = vpop.f32.mrf.mxu0
        %v717 = vadd.f32 0.0, %v716
        %v718 = vpop.f32.mrf.mxu0
        %v719 = vadd.f32 0.0, %v718
        %720 = vmatmul.bf16.gmra.mxu0 %v528
        %v721 = vpop.f32.mrf.mxu0
        %v722 = vadd.f32 0.0, %v721
        %v723 = vpop.f32.mrf.mxu0
        %v724 = vadd.f32 0.0, %v723
        %725 = vmatmul.bf16.gmra.mxu0 %v530
        %v726 = vpop.f32.mrf.mxu0
        %v727 = vadd.f32 0.0, %v726
        %v728 = vpop.f32.mrf.mxu0
        %v729 = vadd.f32 0.0, %v728
        %730 = vmatmul.bf16.gmra.mxu0 %v532
        %v731 = vpop.f32.mrf.mxu0
        %v732 = vadd.f32 0.0, %v731
        %v733 = vpop.f32.mrf.mxu0
        %v734 = vadd.f32 0.0, %v733
        %735 = vmatmul.bf16.gmra.mxu0 %v534
        %v736 = vpop.f32.mrf.mxu0
        %v737 = vadd.f32 0.0, %v736
        %v738 = vpop.f32.mrf.mxu0
        %v739 = vadd.f32 0.0, %v738
        %740 = vmatmul.bf16.gmra.mxu0 %v536
        %v741 = vpop.f32.mrf.mxu0
        %v742 = vadd.f32 0.0, %v741
        %v743 = vpop.f32.mrf.mxu0
        %v744 = vadd.f32 0.0, %v743
        %745 = vmatmul.bf16.gmra.mxu0 %v538
        %v746 = vpop.f32.mrf.mxu0
        %v747 = vadd.f32 0.0, %v746
        %v748 = vpop.f32.mrf.mxu0
        %v749 = vadd.f32 0.0, %v748
        %750 = vmatmul.bf16.gmra.mxu0 %v540
        %v751 = vpop.f32.mrf.mxu0
        %v752 = vadd.f32 0.0, %v751
        %v753 = vpop.f32.mrf.mxu0
        %v754 = vadd.f32 0.0, %v753
        %755 = vmatmul.bf16.gmra.mxu0 %v542
        %v756 = vpop.f32.mrf.mxu0
        %v757 = vadd.f32 0.0, %v756
        %v758 = vpop.f32.mrf.mxu0
        %v759 = vadd.f32 0.0, %v758
        %760 = vdwg.mxu0
        %761 = vmatpush.bf16.msra.mxu0 %v655
        %762 = vmatpush.bf16.msra.mxu0 %v654
        %763 = vmatpush.bf16.msra.mxu0 %v653
        %764 = vmatpush.bf16.msra.mxu0 %v652
        %765 = vmatpush.bf16.msra.mxu0 %v651
        %766 = vmatpush.bf16.msra.mxu0 %v650
        %767 = vmatpush.bf16.msra.mxu0 %v649
        %768 = vmatpush.bf16.msra.mxu0 %v648
        %769 = vmatmul.bf16.gmra.mxu0 %v513
        %v770 = vpop.f32.mrf.mxu0
        %v771 = vadd.f32 %v682, %v770
        %v772 = vpop.f32.mrf.mxu0
        %v773 = vadd.f32 %v684, %v772
        %774 = vmatmul.bf16.gmra.mxu0 %v515
        %v775 = vpop.f32.mrf.mxu0
        %v776 = vadd.f32 %v687, %v775
        %v777 = vpop.f32.mrf.mxu0
        %v778 = vadd.f32 %v689, %v777
        %779 = vmatmul.bf16.gmra.mxu0 %v517
        %v780 = vpop.f32.mrf.mxu0
        %v781 = vadd.f32 %v692, %v780
        %v782 = vpop.f32.mrf.mxu0
        %v783 = vadd.f32 %v694, %v782
        %784 = vmatmul.bf16.gmra.mxu0 %v519
        %v785 = vpop.f32.mrf.mxu0
        %v786 = vadd.f32 %v697, %v785
        %v787 = vpop.f32.mrf.mxu0
        %v788 = vadd.f32 %v699, %v787
        %789 = vmatmul.bf16.gmra.mxu0 %v521
        %v790 = vpop.f32.mrf.mxu0
        %v791 = vadd.f32 %v702, %v790
        %v792 = vpop.f32.mrf.mxu0
        %v793 = vadd.f32 %v704, %v792
        %794 = vmatmul.bf16.gmra.mxu0 %v523
        %v795 = vpop.f32.mrf.mxu0
        %v796 = vadd.f32 %v707, %v795
        %v797 = vpop.f32.mrf.mxu0
        %v798 = vadd.f32 %v709, %v797
        %799 = vmatmul.bf16.gmra.mxu0 %v525
        %v800 = vpop.f32.mrf.mxu0
        %v801 = vadd.f32 %v712, %v800
        %v802 = vpop.f32.mrf.mxu0
        %v803 = vadd.f32 %v714, %v802
        %804 = vmatmul.bf16.gmra.mxu0 %v527
        %v805 = vpop.f32.mrf.mxu0
        %v806 = vadd.f32 %v717, %v805
        %v807 = vpop.f32.mrf.mxu0
        %v808 = vadd.f32 %v719, %v807
        %809 = vmatmul.bf16.gmra.mxu0 %v529
        %v810 = vpop.f32.mrf.mxu0
        %v811 = vadd.f32 %v722, %v810
        %v812 = vpop.f32.mrf.mxu0
        %v813 = vadd.f32 %v724, %v812
        %814 = vmatmul.bf16.gmra.mxu0 %v531
        %v815 = vpop.f32.mrf.mxu0
        %v816 = vadd.f32 %v727, %v815
        %v817 = vpop.f32.mrf.mxu0
        %v818 = vadd.f32 %v729, %v817
        %819 = vmatmul.bf16.gmra.mxu0 %v533
        %v820 = vpop.f32.mrf.mxu0
        %v821 = vadd.f32 %v732, %v820
        %v822 = vpop.f32.mrf.mxu0
        %v823 = vadd.f32 %v734, %v822
        %824 = vmatmul.bf16.gmra.mxu0 %v535
        %v825 = vpop.f32.mrf.mxu0
        %v826 = vadd.f32 %v737, %v825
        %v827 = vpop.f32.mrf.mxu0
        %v828 = vadd.f32 %v739, %v827
        %829 = vmatmul.bf16.gmra.mxu0 %v537
        %v830 = vpop.f32.mrf.mxu0
        %v831 = vadd.f32 %v742, %v830
        %v832 = vpop.f32.mrf.mxu0
        %v833 = vadd.f32 %v744, %v832
        %834 = vmatmul.bf16.gmra.mxu0 %v539
        %v835 = vpop.f32.mrf.mxu0
        %v836 = vadd.f32 %v747, %v835
        %v837 = vpop.f32.mrf.mxu0
        %v838 = vadd.f32 %v749, %v837
        %839 = vmatmul.bf16.gmra.mxu0 %v541
        %v840 = vpop.f32.mrf.mxu0
        %v841 = vadd.f32 %v752, %v840
        %v842 = vpop.f32.mrf.mxu0
        %v843 = vadd.f32 %v754, %v842
        %844 = vmatmul.bf16.gmra.mxu0 %v543
        %v845 = vpop.f32.mrf.mxu0
        %v846 = vadd.f32 %v757, %v845
        %v847 = vpop.f32.mrf.mxu0
        %v848 = vadd.f32 %v759, %v847
        %849 = vdwg.mxu0
        %v850 = vadd.f32 %v352, %v771
        %v851 = vadd.f32 %v353, %v773
        %v852 = vadd.f32 %v354, %v776
        %v853 = vadd.f32 %v355, %v778
        %v854 = vadd.f32 %v356, %v781
        %v855 = vadd.f32 %v357, %v783
        %v856 = vadd.f32 %v358, %v786
        %v857 = vadd.f32 %v359, %v788
        %v858 = vadd.f32 %v360, %v791
        %v859 = vadd.f32 %v361, %v793
        %v860 = vadd.f32 %v362, %v796
        %v861 = vadd.f32 %v363, %v798
        %v862 = vadd.f32 %v364, %v801
        %v863 = vadd.f32 %v365, %v803
        %v864 = vadd.f32 %v366, %v806
        %v865 = vadd.f32 %v367, %v808
        %v866 = vadd.f32 %v368, %v811
        %v867 = vadd.f32 %v369, %v813
        %v868 = vadd.f32 %v370, %v816
        %v869 = vadd.f32 %v371, %v818
        %v870 = vadd.f32 %v372, %v821
        %v871 = vadd.f32 %v373, %v823
        %v872 = vadd.f32 %v374, %v826
        %v873 = vadd.f32 %v375, %v828
        %v874 = vadd.f32 %v376, %v831
        %v875 = vadd.f32 %v377, %v833
        %v876 = vadd.f32 %v378, %v836
        %v877 = vadd.f32 %v379, %v838
        %v878 = vadd.f32 %v380, %v841
        %v879 = vadd.f32 %v381, %v843
        %v880 = vadd.f32 %v382, %v846
        %v881 = vadd.f32 %v383, %v848
        %882 = vst [vmem:[%s255] sm:$0xff] %v850
        %883 = vst [vmem:[%s255 + $0x8] sm:$0xff] %v851
        %884 = vst [vmem:[%s255 + $0x10] sm:$0xff] %v852
        %885 = vst [vmem:[%s255 + $0x18] sm:$0xff] %v853
        %886 = vst [vmem:[%s255 + $0x20] sm:$0xff] %v854
        %887 = vst [vmem:[%s255 + $0x28] sm:$0xff] %v855
        %888 = vst [vmem:[%s255 + $0x30] sm:$0xff] %v856
        %889 = vst [vmem:[%s255 + $0x38] sm:$0xff] %v857
        %890 = vst [vmem:[%s255 + $0x40] sm:$0xff] %v858
        %891 = vst [vmem:[%s255 + $0x48] sm:$0xff] %v859
        %892 = vst [vmem:[%s255 + $0x50] sm:$0xff] %v860
        %893 = vst [vmem:[%s255 + $0x58] sm:$0xff] %v861
        %894 = vst [vmem:[%s255 + $0x60] sm:$0xff] %v862
        %895 = vst [vmem:[%s255 + $0x68] sm:$0xff] %v863
        %896 = vst [vmem:[%s255 + $0x70] sm:$0xff] %v864
        %897 = vst [vmem:[%s255 + $0x78] sm:$0xff] %v865
        %898 = vst [vmem:[%s255 + $0x80] sm:$0xff] %v866
        %899 = vst [vmem:[%s255 + $0x88] sm:$0xff] %v867
        %900 = vst [vmem:[%s255 + $0x90] sm:$0xff] %v868
        %901 = vst [vmem:[%s255 + $0x98] sm:$0xff] %v869
        %902 = vst [vmem:[%s255 + $0xa0] sm:$0xff] %v870
        %903 = vst [vmem:[%s255 + $0xa8] sm:$0xff] %v871
        %904 = vst [vmem:[%s255 + $0xb0] sm:$0xff] %v872
        %905 = vst [vmem:[%s255 + $0xb8] sm:$0xff] %v873
        %906 = vst [vmem:[%s255 + $0xc0] sm:$0xff] %v874
        %907 = vst [vmem:[%s255 + $0xc8] sm:$0xff] %v875
        %908 = vst [vmem:[%s255 + $0xd0] sm:$0xff] %v876
        %909 = vst [vmem:[%s255 + $0xd8] sm:$0xff] %v877
        %910 = vst [vmem:[%s255 + $0xe0] sm:$0xff] %v878
        %911 = vst [vmem:[%s255 + $0xe8] sm:$0xff] %v879
        %912 = vst [vmem:[%s255 + $0xf0] sm:$0xff] %v880
        %913 = vst [vmem:[%s255 + $0xf8] sm:$0xff] %v881
        %s914 = sand.u32 %s128, 1
        %s915 = sand.u32 %s128, 1
        %s916 = smul.addr %s915, 256
        %s917 = scalar_lea.vmem [#allocation4], %s916
        // Predicated region
        $region41: #{tpu_custom_call.1} parent=31 // pred_check
          %p918 = pneg %p138
        $region42: #{tpu_custom_call.1} parent=31 // pred_check_branch
          %920 = sbr.rel (%p918) target = $region44
        $region43: #{tpu_custom_call.1} parent=31 // pred_region
          %s921 = smul.u32 32, %s22
          %s922 = ssub.s32 80, %s921
          %p923 = scmp.lt.s32.totalorder %s922, 32
          %s924 = scalar_select %p923, %s922, 32
          %s925 = smul.u32 8, %s924
          %p926 = scmp.ne.s32.totalorder 0, %s925
          %s927 = sadd.s32 %s23, %s921
          %s928 = smul.addr %s927, 8
          %s929 = scalar_lea.vmem %s3, %s928
          // Predicated region
          $region45: #{tpu_custom_call.1} parent=43 // pred_check
            %p930 = pneg %p926
          $region46: #{tpu_custom_call.1} parent=43 // pred_check_branch
            %932 = sbr.rel (%p930) target = $region48
          $region47: #{tpu_custom_call.1} parent=43 // pred_region
            // Predicated region
            $region49: #{tpu_custom_call.1} parent=47 // pred_check
              _
            $region50: #{tpu_custom_call.1} parent=47 // pred_check_branch
              %934 = sbr.rel (0) target = $region52
            $region51: #{tpu_custom_call.1} parent=47 // pred_region
              // Predicated region
              $region71: #{tpu_custom_call.1} parent=51 // pred_check
                _
              $region72: #{tpu_custom_call.1} parent=51 // pred_check_branch
                %1046 = sbr.rel (0) target = $region74
              $region73: #{tpu_custom_call.1} parent=51 // pred_region
                %s1047 = sshrl.u32 %s924, 5
                // While loop
                $region75: #{tpu_custom_call.1} parent=73 // loop_pre_header
                  _
                $region76: #{tpu_custom_call.1} parent=73 // loop_header
                  %s1049 = sphi 0, %s1051
                  %p1050 = scmp.ge.s32.totalorder %s1049, %s1047
                  %s1054 = sphi 0, %s1123
                  %s1055 = sphi %s917, %s1126
                  %s1056 = sphi %s929, %s1127
                $region77: #{tpu_custom_call.1} parent=73 // loop_header_branch
                  %1053 = sbr.rel (%p1050) target = $region81
                $region78: #{tpu_custom_call.1} parent=73 // loop_body
                  %v1057 = vld [vmem:[%s1055] sm:$0xff]
                  %1058 = vst [vmem:[%s1056] sm:$0xff] %v1057
                  %v1059 = vld [vmem:[%s1055 + $0x8] sm:$0xff]
                  %1060 = vst [vmem:[%s1056 + $0x8] sm:$0xff] %v1059
                  %v1061 = vld [vmem:[%s1055 + $0x10] sm:$0xff]
                  %1062 = vst [vmem:[%s1056 + $0x10] sm:$0xff] %v1061
                  %v1063 = vld [vmem:[%s1055 + $0x18] sm:$0xff]
                  %1064 = vst [vmem:[%s1056 + $0x18] sm:$0xff] %v1063
                  %v1065 = vld [vmem:[%s1055 + $0x20] sm:$0xff]
                  %1066 = vst [vmem:[%s1056 + $0x20] sm:$0xff] %v1065
                  %v1067 = vld [vmem:[%s1055 + $0x28] sm:$0xff]
                  %1068 = vst [vmem:[%s1056 + $0x28] sm:$0xff] %v1067
                  %v1069 = vld [vmem:[%s1055 + $0x30] sm:$0xff]
                  %1070 = vst [vmem:[%s1056 + $0x30] sm:$0xff] %v1069
                  %v1071 = vld [vmem:[%s1055 + $0x38] sm:$0xff]
                  %1072 = vst [vmem:[%s1056 + $0x38] sm:$0xff] %v1071
                  %v1073 = vld [vmem:[%s1055 + $0x40] sm:$0xff]
                  %1074 = vst [vmem:[%s1056 + $0x40] sm:$0xff] %v1073
                  %v1075 = vld [vmem:[%s1055 + $0x48] sm:$0xff]
                  %1076 = vst [vmem:[%s1056 + $0x48] sm:$0xff] %v1075
                  %v1077 = vld [vmem:[%s1055 + $0x50] sm:$0xff]
                  %1078 = vst [vmem:[%s1056 + $0x50] sm:$0xff] %v1077
                  %v1079 = vld [vmem:[%s1055 + $0x58] sm:$0xff]
                  %1080 = vst [vmem:[%s1056 + $0x58] sm:$0xff] %v1079
                  %v1081 = vld [vmem:[%s1055 + $0x60] sm:$0xff]
                  %1082 = vst [vmem:[%s1056 + $0x60] sm:$0xff] %v1081
                  %v1083 = vld [vmem:[%s1055 + $0x68] sm:$0xff]
                  %1084 = vst [vmem:[%s1056 + $0x68] sm:$0xff] %v1083
                  %v1085 = vld [vmem:[%s1055 + $0x70] sm:$0xff]
                  %1086 = vst [vmem:[%s1056 + $0x70] sm:$0xff] %v1085
                  %v1087 = vld [vmem:[%s1055 + $0x78] sm:$0xff]
                  %1088 = vst [vmem:[%s1056 + $0x78] sm:$0xff] %v1087
                  %v1089 = vld [vmem:[%s1055 + $0x80] sm:$0xff]
                  %1090 = vst [vmem:[%s1056 + $0x80] sm:$0xff] %v1089
                  %v1091 = vld [vmem:[%s1055 + $0x88] sm:$0xff]
                  %1092 = vst [vmem:[%s1056 + $0x88] sm:$0xff] %v1091
                  %v1093 = vld [vmem:[%s1055 + $0x90] sm:$0xff]
                  %1094 = vst [vmem:[%s1056 + $0x90] sm:$0xff] %v1093
                  %v1095 = vld [vmem:[%s1055 + $0x98] sm:$0xff]
                  %1096 = vst [vmem:[%s1056 + $0x98] sm:$0xff] %v1095
                  %v1097 = vld [vmem:[%s1055 + $0xa0] sm:$0xff]
                  %1098 = vst [vmem:[%s1056 + $0xa0] sm:$0xff] %v1097
                  %v1099 = vld [vmem:[%s1055 + $0xa8] sm:$0xff]
                  %1100 = vst [vmem:[%s1056 + $0xa8] sm:$0xff] %v1099
                  %v1101 = vld [vmem:[%s1055 + $0xb0] sm:$0xff]
                  %1102 = vst [vmem:[%s1056 + $0xb0] sm:$0xff] %v1101
                  %v1103 = vld [vmem:[%s1055 + $0xb8] sm:$0xff]
                  %1104 = vst [vmem:[%s1056 + $0xb8] sm:$0xff] %v1103
                  %v1105 = vld [vmem:[%s1055 + $0xc0] sm:$0xff]
                  %1106 = vst [vmem:[%s1056 + $0xc0] sm:$0xff] %v1105
                  %v1107 = vld [vmem:[%s1055 + $0xc8] sm:$0xff]
                  %1108 = vst [vmem:[%s1056 + $0xc8] sm:$0xff] %v1107
                  %v1109 = vld [vmem:[%s1055 + $0xd0] sm:$0xff]
                  %1110 = vst [vmem:[%s1056 + $0xd0] sm:$0xff] %v1109
                  %v1111 = vld [vmem:[%s1055 + $0xd8] sm:$0xff]
                  %1112 = vst [vmem:[%s1056 + $0xd8] sm:$0xff] %v1111
                  %v1113 = vld [vmem:[%s1055 + $0xe0] sm:$0xff]
                  %1114 = vst [vmem:[%s1056 + $0xe0] sm:$0xff] %v1113
                  %v1115 = vld [vmem:[%s1055 + $0xe8] sm:$0xff]
                  %1116 = vst [vmem:[%s1056 + $0xe8] sm:$0xff] %v1115
                  %v1117 = vld [vmem:[%s1055 + $0xf0] sm:$0xff]
                  %1118 = vst [vmem:[%s1056 + $0xf0] sm:$0xff] %v1117
                  %v1119 = vld [vmem:[%s1055 + $0xf8] sm:$0xff]
                  %1120 = vst [vmem:[%s1056 + $0xf8] sm:$0xff] %v1119
                  %s1121 = sadd.s32 1, %s1054
                  %p1122 = scmp.ge.s32.totalorder %s1121, %s1047
                  %s1123 = scalar_select %p1122, 0, %s1121
                  %s1124 = smul.u32 %s1123, 256
                  %s1125 = smul.u32 %s1123, 256
                  %s1126 = scalar_lea.vmem %s917, %s1124 [#allocation4]
                  %s1127 = scalar_lea.vmem %s929, %s1125
                $region79: #{tpu_custom_call.1} parent=73 // loop_footer
                  %s1051 = sadd.s32 %s1049, 1
                $region80: #{tpu_custom_call.1} parent=73 // loop_footer_branch
                  %1048 = sbr.rel target = $region76
                $region81: #{tpu_custom_call.1} parent=73 // loop_exit
                  _
                %s1128 = sshrl.u32 %s924, 5
                %s1129 = sand.u32 %s924, 31
                %s1130 = smul.u32 %s1128, 32
                %s1131 = smul.u32 8, %s1130
                %s1132 = scalar_lea.vmem %s917, %s1131 [#allocation4]
                %s1133 = smul.u32 8, %s1130
                %s1134 = scalar_lea.vmem %s929, %s1133
                // While loop
                $region82: #{tpu_custom_call.1} parent=73 // loop_pre_header
                  _
                $region83: #{tpu_custom_call.1} parent=73 // loop_header
                  %s1136 = sphi 0, %s1138
                  %p1137 = scmp.ge.s32.totalorder %s1136, %s1129
                  %s1141 = sphi 0, %s1148
                  %s1142 = sphi %s1132, %s1151
                  %s1143 = sphi %s1134, %s1152
                $region84: #{tpu_custom_call.1} parent=73 // loop_header_branch
                  %1140 = sbr.rel (%p1137) target = $region88
                $region85: #{tpu_custom_call.1} parent=73 // loop_body
                  %v1144 = vld [vmem:[%s1142] sm:$0xff]
                  %1145 = vst [vmem:[%s1143] sm:$0xff] %v1144
                  %s1146 = sadd.s32 1, %s1141
                  %p1147 = scmp.ge.s32.totalorder %s1146, %s1129
                  %s1148 = scalar_select %p1147, 0, %s1146
                  %s1149 = smul.u32 %s1148, 8
                  %s1150 = smul.u32 %s1148, 8
                  %s1151 = scalar_lea.vmem %s1132, %s1149 [#allocation4]
                  %s1152 = scalar_lea.vmem %s1134, %s1150
                $region86: #{tpu_custom_call.1} parent=73 // loop_footer
                  %s1138 = sadd.s32 %s1136, 1
                $region87: #{tpu_custom_call.1} parent=73 // loop_footer_branch
                  %1135 = sbr.rel target = $region83
                $region88: #{tpu_custom_call.1} parent=73 // loop_exit
                  _
              $region74: #{tpu_custom_call.1} parent=51 // pred_fallthru
                _
              // Predicated region
              $region89: #{tpu_custom_call.1} parent=51 // pred_check
                _
              $region90: #{tpu_custom_call.1} parent=51 // pred_check_branch
                %1154 = sbr.rel target = $region92
              $region91: #{tpu_custom_call.1} parent=51 // pred_region
                _
              $region92: #{tpu_custom_call.1} parent=51 // pred_fallthru
                _
            $region52: #{tpu_custom_call.1} parent=47 // pred_fallthru
              _
            // Predicated region
            $region53: #{tpu_custom_call.1} parent=47 // pred_check
              _
            $region54: #{tpu_custom_call.1} parent=47 // pred_check_branch
              %936 = sbr.rel target = $region56
            $region55: #{tpu_custom_call.1} parent=47 // pred_region
              %s938 = ssub.s32 256, 1
              %s939 = sshrl.u32 %s924, 5
              // While loop
              $region57: #{tpu_custom_call.1} parent=55 // loop_pre_header
                _
              $region58: #{tpu_custom_call.1} parent=55 // loop_header
                %s941 = sphi 0, %s943
                %p942 = scmp.ge.s32.totalorder %s941, %s939
                %s946 = sphi 0, %s1015
                %s947 = sphi %s917, %s1018
                %s948 = sphi %s929, %s1019
              $region59: #{tpu_custom_call.1} parent=55 // loop_header_branch
                %945 = sbr.rel (%p942) target = $region63
              $region60: #{tpu_custom_call.1} parent=55 // loop_body
                %v949 = vld [vmem:[%s947] sm:%s938]
                %950 = vst [vmem:[%s948] sm:%s938] %v949
                %v951 = vld [vmem:[%s947 + $0x8] sm:%s938]
                %952 = vst [vmem:[%s948 + $0x8] sm:%s938] %v951
                %v953 = vld [vmem:[%s947 + $0x10] sm:%s938]
                %954 = vst [vmem:[%s948 + $0x10] sm:%s938] %v953
                %v955 = vld [vmem:[%s947 + $0x18] sm:%s938]
                %956 = vst [vmem:[%s948 + $0x18] sm:%s938] %v955
                %v957 = vld [vmem:[%s947 + $0x20] sm:%s938]
                %958 = vst [vmem:[%s948 + $0x20] sm:%s938] %v957
                %v959 = vld [vmem:[%s947 + $0x28] sm:%s938]
                %960 = vst [vmem:[%s948 + $0x28] sm:%s938] %v959
                %v961 = vld [vmem:[%s947 + $0x30] sm:%s938]
                %962 = vst [vmem:[%s948 + $0x30] sm:%s938] %v961
                %v963 = vld [vmem:[%s947 + $0x38] sm:%s938]
                %964 = vst [vmem:[%s948 + $0x38] sm:%s938] %v963
                %v965 = vld [vmem:[%s947 + $0x40] sm:%s938]
                %966 = vst [vmem:[%s948 + $0x40] sm:%s938] %v965
                %v967 = vld [vmem:[%s947 + $0x48] sm:%s938]
                %968 = vst [vmem:[%s948 + $0x48] sm:%s938] %v967
                %v969 = vld [vmem:[%s947 + $0x50] sm:%s938]
                %970 = vst [vmem:[%s948 + $0x50] sm:%s938] %v969
                %v971 = vld [vmem:[%s947 + $0x58] sm:%s938]
                %972 = vst [vmem:[%s948 + $0x58] sm:%s938] %v971
                %v973 = vld [vmem:[%s947 + $0x60] sm:%s938]
                %974 = vst [vmem:[%s948 + $0x60] sm:%s938] %v973
                %v975 = vld [vmem:[%s947 + $0x68] sm:%s938]
                %976 = vst [vmem:[%s948 + $0x68] sm:%s938] %v975
                %v977 = vld [vmem:[%s947 + $0x70] sm:%s938]
                %978 = vst [vmem:[%s948 + $0x70] sm:%s938] %v977
                %v979 = vld [vmem:[%s947 + $0x78] sm:%s938]
                %980 = vst [vmem:[%s948 + $0x78] sm:%s938] %v979
                %v981 = vld [vmem:[%s947 + $0x80] sm:%s938]
                %982 = vst [vmem:[%s948 + $0x80] sm:%s938] %v981
                %v983 = vld [vmem:[%s947 + $0x88] sm:%s938]
                %984 = vst [vmem:[%s948 + $0x88] sm:%s938] %v983
                %v985 = vld [vmem:[%s947 + $0x90] sm:%s938]
                %986 = vst [vmem:[%s948 + $0x90] sm:%s938] %v985
                %v987 = vld [vmem:[%s947 + $0x98] sm:%s938]
                %988 = vst [vmem:[%s948 + $0x98] sm:%s938] %v987
                %v989 = vld [vmem:[%s947 + $0xa0] sm:%s938]
                %990 = vst [vmem:[%s948 + $0xa0] sm:%s938] %v989
                %v991 = vld [vmem:[%s947 + $0xa8] sm:%s938]
                %992 = vst [vmem:[%s948 + $0xa8] sm:%s938] %v991
                %v993 = vld [vmem:[%s947 + $0xb0] sm:%s938]
                %994 = vst [vmem:[%s948 + $0xb0] sm:%s938] %v993
                %v995 = vld [vmem:[%s947 + $0xb8] sm:%s938]
                %996 = vst [vmem:[%s948 + $0xb8] sm:%s938] %v995
                %v997 = vld [vmem:[%s947 + $0xc0] sm:%s938]
                %998 = vst [vmem:[%s948 + $0xc0] sm:%s938] %v997
                %v999 = vld [vmem:[%s947 + $0xc8] sm:%s938]
                %1000 = vst [vmem:[%s948 + $0xc8] sm:%s938] %v999
                %v1001 = vld [vmem:[%s947 + $0xd0] sm:%s938]
                %1002 = vst [vmem:[%s948 + $0xd0] sm:%s938] %v1001
                %v1003 = vld [vmem:[%s947 + $0xd8] sm:%s938]
                %1004 = vst [vmem:[%s948 + $0xd8] sm:%s938] %v1003
                %v1005 = vld [vmem:[%s947 + $0xe0] sm:%s938]
                %1006 = vst [vmem:[%s948 + $0xe0] sm:%s938] %v1005
                %v1007 = vld [vmem:[%s947 + $0xe8] sm:%s938]
                %1008 = vst [vmem:[%s948 + $0xe8] sm:%s938] %v1007
                %v1009 = vld [vmem:[%s947 + $0xf0] sm:%s938]
                %1010 = vst [vmem:[%s948 + $0xf0] sm:%s938] %v1009
                %v1011 = vld [vmem:[%s947 + $0xf8] sm:%s938]
                %1012 = vst [vmem:[%s948 + $0xf8] sm:%s938] %v1011
                %s1013 = sadd.s32 1, %s946
                %p1014 = scmp.ge.s32.totalorder %s1013, %s939
                %s1015 = scalar_select %p1014, 0, %s1013
                %s1016 = smul.u32 %s1015, 256
                %s1017 = smul.u32 %s1015, 256
                %s1018 = scalar_lea.vmem %s917, %s1016 [#allocation4]
                %s1019 = scalar_lea.vmem %s929, %s1017
              $region61: #{tpu_custom_call.1} parent=55 // loop_footer
                %s943 = sadd.s32 %s941, 1
              $region62: #{tpu_custom_call.1} parent=55 // loop_footer_branch
                %940 = sbr.rel target = $region58
              $region63: #{tpu_custom_call.1} parent=55 // loop_exit
                _
              %s1020 = sshrl.u32 %s924, 5
              %s1021 = sand.u32 %s924, 31
              %s1022 = smul.u32 %s1020, 32
              %s1023 = smul.u32 8, %s1022
              %s1024 = scalar_lea.vmem %s917, %s1023 [#allocation4]
              %s1025 = smul.u32 8, %s1022
              %s1026 = scalar_lea.vmem %s929, %s1025
              // While loop
              $region64: #{tpu_custom_call.1} parent=55 // loop_pre_header
                _
              $region65: #{tpu_custom_call.1} parent=55 // loop_header
                %s1028 = sphi 0, %s1030
                %p1029 = scmp.ge.s32.totalorder %s1028, %s1021
                %s1033 = sphi 0, %s1040
                %s1034 = sphi %s1024, %s1043
                %s1035 = sphi %s1026, %s1044
              $region66: #{tpu_custom_call.1} parent=55 // loop_header_branch
                %1032 = sbr.rel (%p1029) target = $region70
              $region67: #{tpu_custom_call.1} parent=55 // loop_body
                %v1036 = vld [vmem:[%s1034] sm:%s938]
                %1037 = vst [vmem:[%s1035] sm:%s938] %v1036
                %s1038 = sadd.s32 1, %s1033
                %p1039 = scmp.ge.s32.totalorder %s1038, %s1021
                %s1040 = scalar_select %p1039, 0, %s1038
                %s1041 = smul.u32 %s1040, 8
                %s1042 = smul.u32 %s1040, 8
                %s1043 = scalar_lea.vmem %s1024, %s1041 [#allocation4]
                %s1044 = scalar_lea.vmem %s1026, %s1042
              $region68: #{tpu_custom_call.1} parent=55 // loop_footer
                %s1030 = sadd.s32 %s1028, 1
              $region69: #{tpu_custom_call.1} parent=55 // loop_footer_branch
                %1027 = sbr.rel target = $region65
              $region70: #{tpu_custom_call.1} parent=55 // loop_exit
                _
            $region56: #{tpu_custom_call.1} parent=47 // pred_fallthru
              _
          $region48: #{tpu_custom_call.1} parent=43 // pred_fallthru
            _
          %1155 = vnop
        $region44: #{tpu_custom_call.1} parent=31 // pred_fallthru
          _
      $region32: #{tpu_custom_call.1} parent=5 // pred_fallthru
        _
      %p1156 = scmp.le.s32.totalorder 2, %s12
      // Predicated region
      $region93: #{tpu_custom_call.1} parent=5 // pred_check
        %p1157 = pneg %p1156
      $region94: #{tpu_custom_call.1} parent=5 // pred_check_branch
        %1159 = sbr.rel (%p1157) target = $region96
      $region95: #{tpu_custom_call.1} parent=5 // pred_region
        %s1160 = ssub.s32 %s12, 2
        // Predicated region
        $region97: #{tpu_custom_call.1} parent=95 // pred_check
          %p1161 = pneg %p144
        $region98: #{tpu_custom_call.1} parent=95 // pred_check_branch
          %1163 = sbr.rel (%p1161) target = $region100
        $region99: #{tpu_custom_call.1} parent=95 // pred_region
          %s1164 = sand.u32 %s129, 1
          %s1165 = sand.u32 %s129, 1
          %s1166 = smul.addr %s1165, 256
          %s1167 = scalar_lea.vmem [#allocation4], %s1166
        $region100: #{tpu_custom_call.1} parent=95 // pred_fallthru
          _
      $region96: #{tpu_custom_call.1} parent=5 // pred_fallthru
        _
    $region6: #{tpu_custom_call.1} parent=1 // loop_footer
      %s16 = sadd.s32 1, %s12
    $region7: #{tpu_custom_call.1} parent=1 // loop_footer_branch
      %11 = sbr.rel target = $region3
    $region8: #{tpu_custom_call.1} parent=1 // loop_exit
      _
    %1168 = vsyncpa [#allocation3], 1
    %s1169 = scalar_lea.sflag [#allocation3], 1
    %1170 = vsyncpa %s1169, 1

</llo_original>
